<compile_context>
chip_gen: v5e
topology: v5e:2x2
jax: 0.10.0
libtpu: 0.0.40
codegen_flags: <defaults>
</compile_context>

<pallas_src>
import jax
import jax.numpy as jnp
from jax import lax
from jax.experimental import pallas as pl
from jax.experimental.pallas import tpu as pltpu


_FOLD = 8                               # logical rows folded per lane-row
_VMEM_LIMIT = 32 * 1024 * 1024          # scoped VMEM limit (safe on v5e/v6e/v7x)
_TILE_BUDGET = 12 * 1024 * 1024         # double-buffered x+out tile budget


def _pick_tb(rows, bytes_per_row, max_tb):
    """Largest batch tile whose double-buffered tiles fit the VMEM budget."""
    cap = max(_TILE_BUDGET // (2 * bytes_per_row), 8)
    tb = min(rows, cap, max_tb)
    if rows > 8:
        tb = max((tb // 8) * 8, 8)      # sublane-aligned
    else:
        tb = rows                       # block dim == full array dim is allowed
    return tb


# --------------------------------------------------------------------------
# Kernels
# --------------------------------------------------------------------------
def _folded_linear_relu_kernel(x_ref, w_ref, b_ref, o_ref):
    # x_ref: [TB, 8*IN] f32   w_ref: [8*IN, 8*OUT] bf16 (block-diagonal)
    # b_ref: [1, 8*OUT] f32   o_ref: [TB, 8*OUT] bf16  (lane-dense, 128 lanes)
    x_bf = x_ref[...].astype(jnp.bfloat16)           # cast in VMEM, not in HBM
    acc = jnp.dot(x_bf, w_ref[...], preferred_element_type=jnp.float32)
    acc = acc + b_ref[...]
    o_ref[...] = jnp.maximum(acc, 0.0).astype(o_ref.dtype)


def _linear_relu_nll_kernel(x_ref, w_ref, b_ref, lbl_ref, o_ref, nll_ref):
    # Unfolded training path: matmul + bias + ReLU, plus fused log_softmax/NLL
    # epilogue on the VMEM-resident f32 logits tile (exp/log use the EUP slot).
    x_bf = x_ref[...].astype(jnp.bfloat16)
    acc = jnp.dot(x_bf, w_ref[...], preferred_element_type=jnp.float32)
    acc = acc + b_ref[...]
    logits = jnp.maximum(acc, 0.0)
    o_ref[...] = logits.astype(o_ref.dtype)          # bf16 writeback

    m = jnp.max(logits, axis=-1, keepdims=True)
    z = logits - m
    lse = jnp.log(jnp.sum(jnp.exp(z), axis=-1, keepdims=True))
    logp = z - lse                                            # [TB, OUT] f32
    lane = lax.broadcasted_iota(jnp.int32, logp.shape, 1)
    onehot = (lane == lbl_ref[...]).astype(jnp.float32)       # lbl: [TB, 1]
    nll_ref[...] = -jnp.sum(logp * onehot, axis=-1, keepdims=True)


# --------------------------------------------------------------------------
# Wrappers
# --------------------------------------------------------------------------
def linear_relu_pallas_infer(x, w_bd, b_bd, out_features, tb=None):
    """y = relu(x @ W^T + b), lane-dense 8-row-folded layout, bf16 output."""
    batch, in_f = x.shape
    fold = _FOLD
    pad = (-batch) % fold
    if pad:                              # rare tiny tail pad to a fold multiple
        x = jnp.pad(x, ((0, pad), (0, 0)))
    rows = (batch + pad) // fold
    xf = x.reshape(rows, fold * in_f)    # contiguous -> free view
    fout = w_bd.shape[1]                 # fold * out_features

    bytes_per_row = 4 * fold * in_f + 2 * fout        # f32 x in + bf16 out
    if tb is None:
        tb = _pick_tb(rows, bytes_per_row, 4096)
    grid = (pl.cdiv(rows, tb),)

    out = pl.pallas_call(
        _folded_linear_relu_kernel,
        out_shape=jax.ShapeDtypeStruct((rows, fout), jnp.bfloat16),
        grid=grid,
        in_specs=[
            pl.BlockSpec((tb, fold * in_f), lambda i: (i, 0)),
            pl.BlockSpec(w_bd.shape, lambda i: (0, 0)),       # resident weight
            pl.BlockSpec((1, fout), lambda i: (0, 0)),        # resident bias
        ],
        out_specs=pl.BlockSpec((tb, fout), lambda i: (i, 0)),
        compiler_params=pltpu.CompilerParams(
            dimension_semantics=("parallel",),
            vmem_limit_bytes=_VMEM_LIMIT),
        cost_estimate=pl.CostEstimate(
            flops=2 * rows * (fold * in_f) * fout,
            transcendentals=0,
            bytes_accessed=(4 * rows * fold * in_f + 2 * rows * fout
                            + 2 * int(w_bd.size) + 4 * fout)),
    )(xf, w_bd, b_bd)

    return out.reshape(rows * fold, out_features)[:batch]


def linear_relu_nll_pallas(x, w_t_bf16, b2d, labels, tb=None):
    """relu-linear forward + fused per-row NLL loss (unfolded layout)."""
    batch, in_f = x.shape
    out_f = w_t_bf16.shape[1]
    lbl = labels.astype(jnp.int32).reshape(batch, 1)

    bytes_per_row = 4 * in_f + 2 * out_f + 4 + 4
    if tb is None:
        tb = _pick_tb(batch, bytes_per_row, 32768)
    grid = (pl.cdiv(batch, tb),)

    logits, nll = pl.pallas_call(
        _linear_relu_nll_kernel,
        out_shape=(jax.ShapeDtypeStruct((batch, out_f), jnp.bfloat16),
                   jax.ShapeDtypeStruct((batch, 1), jnp.float32)),
        grid=grid,
        in_specs=[
            pl.BlockSpec((tb, in_f), lambda i: (i, 0)),
            pl.BlockSpec((in_f, out_f), lambda i: (0, 0)),
            pl.BlockSpec((1, out_f), lambda i: (0, 0)),
            pl.BlockSpec((tb, 1), lambda i: (i, 0)),
        ],
        out_specs=(pl.BlockSpec((tb, out_f), lambda i: (i, 0)),
                   pl.BlockSpec((tb, 1), lambda i: (i, 0))),
        compiler_params=pltpu.CompilerParams(
            dimension_semantics=("parallel",),
            vmem_limit_bytes=_VMEM_LIMIT),
        cost_estimate=pl.CostEstimate(
            flops=2 * batch * in_f * out_f + 8 * batch * out_f,
            transcendentals=batch * out_f + batch,
            bytes_accessed=(4 * batch * in_f + 2 * batch * out_f
                            + 4 * batch + 4 * batch
                            + 2 * int(w_t_bf16.size) + 4 * out_f)),
    )(x, w_t_bf16, b2d, lbl)

    loss = jnp.mean(nll[:, 0])
    return logits, loss


# --------------------------------------------------------------------------
# Modules
# --------------------------------------------------------------------------
class InnerModel:
    """Deterministic synthetic inner model: ReLU(Linear(x)) classifier."""

    def __init__(self, in_features=32, out_features=16, key=None):
        key = jax.random.PRNGKey(42) if key is None else key
        kw, kb = jax.random.split(key)
        self.in_features = in_features
        self.out_features = out_features
        # PyTorch nn.Linear convention: W is [out, in].
        self.weight = (jax.random.normal(kw, (out_features, in_features),
                                         jnp.float32) * 0.05)
        self.bias = (jax.random.normal(kb, (out_features,), jnp.float32) * 0.05)
        # Hoisted once (no per-call transpose/reshape glue):
        self.w_t = self.weight.T.astype(jnp.bfloat16)          # [IN, OUT] bf16
        self.b2d = self.bias.reshape(1, out_features)           # [1, OUT]  f32
        # Block-diagonal fold-of-8 weight/bias for the lane-dense path:
        eye = jnp.eye(_FOLD, dtype=jnp.float32)
        self.w_bd = jnp.kron(eye, self.weight.T).astype(jnp.bfloat16)  # [256,128]
        self.b_bd = jnp.tile(self.bias, _FOLD).reshape(1, _FOLD * out_features)

    def __call__(self, x, label=None):
        if label is None:
            return linear_relu_pallas_infer(x, self.w_bd, self.b_bd,
                                            self.out_features)
        return linear_relu_nll_pallas(x, self.w_t, self.b2d, label)


class WrappedModel:
    """Faithful port of the PyTorch wrapper: pure delegation."""

    def __init__(self, model):
        self.module = model

    def forward(self, x, label=None):
        return self.module(x, label)

    __call__ = forward


# --------------------------------------------------------------------------
# Self-test
# --------------------------------------------------------------------------
if __name__ == "__main__":
    key = jax.random.PRNGKey(0)
    batch, in_features, out_features = 8, 32, 16
    kx, kl = jax.random.split(key)

    x = jax.random.normal(kx, (batch, in_features), jnp.float32)
    labels = jax.random.randint(kl, (batch,), 0, out_features)

    model = WrappedModel(InnerModel(in_features, out_features))

    # ---- inference path (label=None, as in the reference forward) ----
    out = jax.block_until_ready(model(x))
    assert out.shape == (batch, out_features)

    # Reference with identical numerics: bf16-rounded inputs, f32 accumulate.
    x_r = x.astype(jnp.bfloat16).astype(jnp.float32)
    w_r = model.module.w_t.astype(jnp.float32)
    ref = jnp.maximum(x_r @ w_r + model.module.bias, 0.0)
    assert jnp.allclose(out.astype(jnp.float32), ref, atol=2e-2, rtol=2e-2)

    # ---- training path (label given): fused NLL epilogue ----
    logits, loss = jax.block_until_ready(model(x, labels))
    logz = jax.nn.log_softmax(ref, axis=-1)        # f32-precision reference
    ref_loss = -jnp.mean(jnp.take_along_axis(logz, labels[:, None], axis=-1)[:, 0])
    assert jnp.allclose(loss, ref_loss, atol=1e-4, rtol=1e-4)
    assert jnp.allclose(logits.astype(jnp.float32), ref, atol=2e-2, rtol=2e-2)

    # ---- multi-step grid exercise (small forced tile, still lane-dense) ----
    xb = jax.random.normal(kx, (128, in_features), jnp.float32)
    out_b = jax.block_until_ready(
        linear_relu_pallas_infer(xb, model.module.w_bd, model.module.b_bd,
                                 out_features, tb=8))
    ref_b = jnp.maximum(xb.astype(jnp.bfloat16).astype(jnp.float32) @ w_r
                        + model.module.bias, 0.0)
    assert jnp.allclose(out_b.astype(jnp.float32), ref_b, atol=2e-2, rtol=2e-2)

    print("KERNEL_OK")
</pallas_src>

<mosaic_0001>
module attributes {stable_mosaic.version = 11 : i64} {
  func.func @_folded_linear_relu_kernel(%arg0: i32, %arg1: memref<1x256xf32, #tpu.memory_space<vmem>>, %arg2: memref<256x128xbf16, #tpu.memory_space<vmem>>, %arg3: memref<1x128xf32, #tpu.memory_space<vmem>>, %arg4: memref<1x128xbf16, #tpu.memory_space<vmem>>) attributes {dimension_semantics = [#tpu.dimension_semantics<parallel>], iteration_bounds = array<i64: 1>, scalar_prefetch = 0 : i64, scratch_operands = 0 : i64, tpu.core_type = #tpu.core_type<tc>, window_params = [{transform_indices = @transform_0, window_bounds = array<i64: 1, 256>}, {pipeline_mode = #tpu.pipeline_mode<synchronous>, transform_indices = @transform_1, window_bounds = array<i64: 256, 128>}, {pipeline_mode = #tpu.pipeline_mode<synchronous>, transform_indices = @transform_2, window_bounds = array<i64: 1, 128>}, {transform_indices = @transform_3, window_bounds = array<i64: 1, 128>}]} {
    %c0 = arith.constant 0 : index
    %c0_0 = arith.constant 0 : index
    %0 = vector.load %arg1[%c0, %c0_0] : memref<1x256xf32, #tpu.memory_space<vmem>>, vector<1x256xf32>
    %1 = arith.truncf %0 : vector<1x256xf32> to vector<1x256xbf16>
    %c0_1 = arith.constant 0 : index
    %c0_2 = arith.constant 0 : index
    %2 = vector.load %arg2[%c0_1, %c0_2] : memref<256x128xbf16, #tpu.memory_space<vmem>>, vector<256x128xbf16>
    %cst = arith.constant dense<0.000000e+00> : vector<1x128xf32>
    %3 = tpu.matmul %1, %2, %cst {dimension_numbers = #tpu.dot_dimension_numbers<[1], [0], [0], [1], [0, 0, 1, 1], [], []>} : vector<1x256xbf16>, vector<256x128xbf16>, vector<1x128xf32> -> vector<1x128xf32>
    %c0_3 = arith.constant 0 : index
    %c0_4 = arith.constant 0 : index
    %4 = vector.load %arg3[%c0_3, %c0_4] : memref<1x128xf32, #tpu.memory_space<vmem>>, vector<1x128xf32>
    %5 = arith.addf %3, %4 : vector<1x128xf32>
    %cst_5 = arith.constant 0.000000e+00 : f32
    %6 = vector.broadcast %cst_5 : f32 to vector<1x128xf32>
    %7 = arith.maximumf %5, %6 : vector<1x128xf32>
    %8 = arith.truncf %7 : vector<1x128xf32> to vector<1x128xbf16>
    %c0_6 = arith.constant 0 : index
    %c0_7 = arith.constant 0 : index
    %9 = vector.load %arg4[%c0_6, %c0_7] : memref<1x128xbf16, #tpu.memory_space<vmem>>, vector<1x128xbf16>
    tpu.vector_store %arg4[%c0_6, %c0_7], %8 {strides = array<i32>} : memref<1x128xbf16, #tpu.memory_space<vmem>>, vector<1x128xbf16>,
    return
  }
  func.func @transform_0(%arg0: i32) -> (i32, i32) {
    %c0_i32 = arith.constant 0 : i32
    %c0_i32_0 = arith.constant 0 : i32
    return %arg0, %c0_i32 : i32, i32
  }
  func.func @transform_1(%arg0: i32) -> (i32, i32) {
    %c0_i32 = arith.constant 0 : i32
    %c0_i32_0 = arith.constant 0 : i32
    %c0_i32_1 = arith.constant 0 : i32
    return %c0_i32, %c0_i32_0 : i32, i32
  }
  func.func @transform_2(%arg0: i32) -> (i32, i32) {
    %c0_i32 = arith.constant 0 : i32
    %c0_i32_0 = arith.constant 0 : i32
    %c0_i32_1 = arith.constant 0 : i32
    return %c0_i32, %c0_i32_0 : i32, i32
  }
  func.func @transform_3(%arg0: i32) -> (i32, i32) {
    %c0_i32 = arith.constant 0 : i32
    %c0_i32_0 = arith.constant 0 : i32
    return %arg0, %c0_i32 : i32, i32
  }
}

</mosaic_0001>

<llo_original>
// kernel: tpu_custom_call.1
$region0: #{tpu_custom_call.1}
  #allocation0 [shape = 'u32[]', space=smem, size = 0x4, offset = 0x4, fixed_abs, tag = 'smem constant byte address 0x4 - core index']
  #allocation1 [shape = 'u32[72,128]{1,0:T(1,128)}', space=vmem, size = 0x9000, scoped, tag = 'internal scratch']
  %s0 = inlined_call_operand.hbm [shape: f32[1,256], index: 0, kind: input, shape index: {}]
  %s1 = inlined_call_operand.hbm [shape: bf16[256,128], index: 1, kind: input, shape index: {}]
  %s2 = inlined_call_operand.vmem [shape: f32[1,128], index: 2, kind: input, shape index: {}]
  %s3 = inlined_call_operand.hbm [shape: bf16[1,128], index: 3, kind: output, shape index: {}]
  %s4 = sld [smem:[#allocation0]]
  $region30: #{tpu_custom_call.1} parent=0
    _
  %s6 = ssub.s32 1, %s4
  %s7 = scalar_select 0, %s6, %s4
  $region1: #{tpu_custom_call.1} parent=0
    #allocation2 [shape = 'u8[1024]{0}', space=vmem, size = 0x400, scoped, tag = 'input window, operand 0, single buffered']
    #allocation3 [shape = 's32[1]{0}', space=sflag, size = 0x4, scoped, tag = 'scoped memory for tpu_custom_call.1']
    #allocation4 [shape = 's32[1]{0}', space=sflag, size = 0x4, scoped, tag = 'scoped memory for tpu_custom_call.1']
    #allocation5 [shape = 'u8[65536]{0}', space=vmem, size = 0x10000, scoped, tag = 'input window, operand 1, single buffered']
    #allocation6 [shape = 's32[1]{0}', space=sflag, size = 0x4, scoped, tag = 'scoped memory for tpu_custom_call.1']
    #allocation7 [shape = 'u8[512]{0}', space=vmem, size = 0x400, scoped, tag = 'output window, operand 0, single buffered']
    %8 = vsyncpa [#allocation3], 0
    %9 = vsyncpa [#allocation6], 0
    %10 = vsyncpa [#allocation4], 0
    // Predicated region
    $region2: #{tpu_custom_call.1} parent=1 // pred_check
      _
    $region3: #{tpu_custom_call.1} parent=1 // pred_check_branch
      %12 = sbr.rel (0) target = $region5
    $region4: #{tpu_custom_call.1} parent=1 // pred_region
      %14 = vsyncadd [#allocation3], 0
      %s16 = sshll.u32 %s0, 4
      %s17 = int_to_ptr.hbm [resolvable:$true] %s16
      %s18 = sshll.u32 [#allocation2], 4
      %s19 = int_to_ptr.vmem [resolvable:$true] %s18
      %21 = dma.hbm_to_vmem [thread:$0]  %s17, 32, %s19, [#allocation3]
    $region5: #{tpu_custom_call.1} parent=1 // pred_fallthru
      _
    // Predicated region
    $region6: #{tpu_custom_call.1} parent=1 // pred_check
      _
    $region7: #{tpu_custom_call.1} parent=1 // pred_check_branch
      %23 = sbr.rel (0) target = $region9
    $region8: #{tpu_custom_call.1} parent=1 // pred_region
      %25 = vsyncadd [#allocation6], 0
      %s26 = sshll.u32 %s1, 4
      %s27 = int_to_ptr.hbm [resolvable:$true] %s26
      %s28 = sshll.u32 [#allocation5], 4
      %s29 = int_to_ptr.vmem [resolvable:$true] %s28
      %34 = dma.hbm_to_vmem [thread:$0]  %s27, 2048, %s29, [#allocation6], 64, 64, 4
    $region9: #{tpu_custom_call.1} parent=1 // pred_fallthru
      _
    // Predicated region
    $region10: #{tpu_custom_call.1} parent=1 // pred_check
      _
    $region11: #{tpu_custom_call.1} parent=1 // pred_check_branch
      %36 = sbr.rel (0) target = $region13
    $region12: #{tpu_custom_call.1} parent=1 // pred_region
      _
    $region13: #{tpu_custom_call.1} parent=1 // pred_fallthru
      _
    // Predicated region
    $region14: #{tpu_custom_call.1} parent=1 // pred_check
      _
    $region15: #{tpu_custom_call.1} parent=1 // pred_check_branch
      %38 = sbr.rel (0) target = $region17
    $region16: #{tpu_custom_call.1} parent=1 // pred_region
      %40 = dma.done [#allocation3], 32
    $region17: #{tpu_custom_call.1} parent=1 // pred_fallthru
      _
    // Predicated region
    $region18: #{tpu_custom_call.1} parent=1 // pred_check
      _
    $region19: #{tpu_custom_call.1} parent=1 // pred_check_branch
      %42 = sbr.rel (0) target = $region21
    $region20: #{tpu_custom_call.1} parent=1 // pred_region
      %44 = dma.done [#allocation6], 2048
    $region21: #{tpu_custom_call.1} parent=1 // pred_fallthru
      _
    %v45 = vld [vmem:[#allocation2] sm:$0x3]
    %v47 = vperm.slane %v45, 0
    %v48 = vperm.slane %v45, 1
    %v51 = vpack.c.bf16 %v47, %v47
    %v52 = vpack.c.bf16 %v48, %v48
    %v53 = vld [vmem:[#allocation5] sm:$0xf]
    %v54 = vld [vmem:[#allocation5 + $0x4] sm:$0xf]
    %v55 = vld [vmem:[#allocation5 + $0x8] sm:$0xf]
    %v56 = vld [vmem:[#allocation5 + $0xc] sm:$0xf]
    %v57 = vld [vmem:[#allocation5 + $0x10] sm:$0xf]
    %v58 = vld [vmem:[#allocation5 + $0x14] sm:$0xf]
    %v59 = vld [vmem:[#allocation5 + $0x18] sm:$0xf]
    %v60 = vld [vmem:[#allocation5 + $0x1c] sm:$0xf]
    %v61 = vld [vmem:[#allocation5 + $0x20] sm:$0xf]
    %v62 = vld [vmem:[#allocation5 + $0x24] sm:$0xf]
    %v63 = vld [vmem:[#allocation5 + $0x28] sm:$0xf]
    %v64 = vld [vmem:[#allocation5 + $0x2c] sm:$0xf]
    %v65 = vld [vmem:[#allocation5 + $0x30] sm:$0xf]
    %v66 = vld [vmem:[#allocation5 + $0x34] sm:$0xf]
    %v67 = vld [vmem:[#allocation5 + $0x38] sm:$0xf]
    %v68 = vld [vmem:[#allocation5 + $0x3c] sm:$0xf]
    %v69 = vld [vmem:[#allocation5 + $0x40] sm:$0xf]
    %v70 = vld [vmem:[#allocation5 + $0x44] sm:$0xf]
    %v71 = vld [vmem:[#allocation5 + $0x48] sm:$0xf]
    %v72 = vld [vmem:[#allocation5 + $0x4c] sm:$0xf]
    %v73 = vld [vmem:[#allocation5 + $0x50] sm:$0xf]
    %v74 = vld [vmem:[#allocation5 + $0x54] sm:$0xf]
    %v75 = vld [vmem:[#allocation5 + $0x58] sm:$0xf]
    %v76 = vld [vmem:[#allocation5 + $0x5c] sm:$0xf]
    %v77 = vld [vmem:[#allocation5 + $0x60] sm:$0xf]
    %v78 = vld [vmem:[#allocation5 + $0x64] sm:$0xf]
    %v79 = vld [vmem:[#allocation5 + $0x68] sm:$0xf]
    %v80 = vld [vmem:[#allocation5 + $0x6c] sm:$0xf]
    %v81 = vld [vmem:[#allocation5 + $0x70] sm:$0xf]
    %v82 = vld [vmem:[#allocation5 + $0x74] sm:$0xf]
    %v83 = vld [vmem:[#allocation5 + $0x78] sm:$0xf]
    %v84 = vld [vmem:[#allocation5 + $0x7c] sm:$0xf]
    %v85 = vld [vmem:[%s2] sm:$0x1]
    %v118 = vunpack.c.l.b16 %v53
    %v119 = vunpack.c.l.b16 %v54
    %v120 = vunpack.c.l.b16 %v55
    %v121 = vunpack.c.l.b16 %v56
    %v122 = vunpack.c.l.b16 %v57
    %v123 = vunpack.c.l.b16 %v58
    %v124 = vunpack.c.l.b16 %v59
    %v125 = vunpack.c.l.b16 %v60
    %v126 = vunpack.c.l.b16 %v61
    %v127 = vunpack.c.l.b16 %v62
    %v128 = vunpack.c.l.b16 %v63
    %v129 = vunpack.c.l.b16 %v64
    %v130 = vunpack.c.l.b16 %v65
    %v131 = vunpack.c.l.b16 %v66
    %v132 = vunpack.c.l.b16 %v67
    %v133 = vunpack.c.l.b16 %v68
    %v134 = vunpack.c.l.b16 %v69
    %v135 = vunpack.c.l.b16 %v70
    %v136 = vunpack.c.l.b16 %v71
    %v137 = vunpack.c.l.b16 %v72
    %v138 = vunpack.c.l.b16 %v73
    %v139 = vunpack.c.l.b16 %v74
    %v140 = vunpack.c.l.b16 %v75
    %v141 = vunpack.c.l.b16 %v76
    %v142 = vunpack.c.l.b16 %v77
    %v143 = vunpack.c.l.b16 %v78
    %v144 = vunpack.c.l.b16 %v79
    %v145 = vunpack.c.l.b16 %v80
    %v146 = vunpack.c.l.b16 %v81
    %v147 = vunpack.c.l.b16 %v82
    %v148 = vunpack.c.l.b16 %v83
    %v149 = vunpack.c.l.b16 %v84
    %v150 = vpack.c.b16 %v119, %v118
    %v151 = vpack.c.b16 %v121, %v120
    %v152 = vpack.c.b16 %v123, %v122
    %v153 = vpack.c.b16 %v125, %v124
    %v154 = vpack.c.b16 %v127, %v126
    %v155 = vpack.c.b16 %v129, %v128
    %v156 = vpack.c.b16 %v131, %v130
    %v157 = vpack.c.b16 %v133, %v132
    %v158 = vpack.c.b16 %v135, %v134
    %v159 = vpack.c.b16 %v137, %v136
    %v160 = vpack.c.b16 %v139, %v138
    %v161 = vpack.c.b16 %v141, %v140
    %v162 = vpack.c.b16 %v143, %v142
    %v163 = vpack.c.b16 %v145, %v144
    %v164 = vpack.c.b16 %v147, %v146
    %v165 = vpack.c.b16 %v149, %v148
    %182 = vmatpush.bf16.msra.mxu0 %v157
    %183 = vmatpush.bf16.msra.mxu0 %v156
    %184 = vmatpush.bf16.msra.mxu0 %v155
    %185 = vmatpush.bf16.msra.mxu0 %v154
    %186 = vmatpush.bf16.msra.mxu0 %v153
    %187 = vmatpush.bf16.msra.mxu0 %v152
    %188 = vmatpush.bf16.msra.mxu0 %v151
    %189 = vmatpush.bf16.msra.mxu0 %v150
    %190 = vmatmul.bf16.gmra.mxu0 %v51
    %v191 = vpop.f32.mrf.mxu0
    %v192 = vadd.f32 %v85, %v191
    %v193 = vpop.f32.mrf.mxu0
    %194 = vdwg.mxu0
    %195 = vmatpush.bf16.msra.mxu0 %v165
    %196 = vmatpush.bf16.msra.mxu0 %v164
    %197 = vmatpush.bf16.msra.mxu0 %v163
    %198 = vmatpush.bf16.msra.mxu0 %v162
    %199 = vmatpush.bf16.msra.mxu0 %v161
    %200 = vmatpush.bf16.msra.mxu0 %v160
    %201 = vmatpush.bf16.msra.mxu0 %v159
    %202 = vmatpush.bf16.msra.mxu0 %v158
    %203 = vmatmul.bf16.gmra.mxu0 %v52
    %v204 = vpop.f32.mrf.mxu0
    %v205 = vadd.f32 %v192, %v204
    %v206 = vpop.f32.mrf.mxu0
    %207 = vdwg.mxu0
    %v208 = vmax.f32 %v205, 0.0
    %v209 = vpack.c.bf16 %v208, %v208
    %vm210 = vcmask 1040384
    %vm211 = vsmask.f32 256
    %vm212 = vmand %vm210, %vm211
    %v213 = vld [vmem:[#allocation7] sm:$0x1]
    %v214 = vsel %vm212, %v209, %v213
    %215 = vst [vmem:[#allocation7] sm:$0x1] %v214
    // Predicated region
    $region22: #{tpu_custom_call.1} parent=1 // pred_check
      _
    $region23: #{tpu_custom_call.1} parent=1 // pred_check_branch
      %217 = sbr.rel (0) target = $region25
    $region24: #{tpu_custom_call.1} parent=1 // pred_region
      %219 = vsyncadd [#allocation4], 0
      %s221 = sshll.u32 [#allocation7], 4
      %s222 = int_to_ptr.vmem [resolvable:$true] %s221
      %s223 = sshll.u32 %s3, 4
      %s224 = int_to_ptr.hbm [resolvable:$true] %s223
      %226 = dma.vmem_to_hbm [thread:$0]  %s222, 16, %s224, [#allocation4]
    $region25: #{tpu_custom_call.1} parent=1 // pred_fallthru
      _
    // Predicated region
    $region26: #{tpu_custom_call.1} parent=1 // pred_check
      _
    $region27: #{tpu_custom_call.1} parent=1 // pred_check_branch
      %228 = sbr.rel (0) target = $region29
    $region28: #{tpu_custom_call.1} parent=1 // pred_region
      %230 = dma.done [#allocation4], 16
    $region29: #{tpu_custom_call.1} parent=1 // pred_fallthru
      _
    %231 = vsyncpa [#allocation3], 1
    %232 = vsyncpa [#allocation6], 1
    %233 = vsyncpa [#allocation4], 1

</llo_original>
